<compile_context>
chip_gen: v6e
topology: v6e:2x2x1
jax: 0.10.0
libtpu: 0.0.40
codegen_flags: <defaults>
</compile_context>

<pallas_src>
import functools

import jax
import jax.numpy as jnp
from jax.experimental import pallas as pl
from jax.experimental.pallas import tpu as pltpu


def _focal_loss_kernel(col_ids_ref, logits_ref, targets_ref, out_ref, *, alpha, gamma):
    # logits_ref: (TILE_N, C) in the input's native dtype; cast on the VMEM tile.
    x = logits_ref[...].astype(jnp.float32)          # (T, C) f32
    t = targets_ref[...]                             # (T, 1) int32
    col = col_ids_ref[...]                           # (1, C) int32, resident across steps

    # --- cross entropy (reduction='none'), numerically stable ---
    m = jnp.max(x, axis=-1, keepdims=True)                        # (T, 1)
    lse = m + jnp.log(jnp.sum(jnp.exp(x - m), axis=-1, keepdims=True))
    # target-class logit via resident iota row + masked lane reduction
    # (no dynamic gather on TPU; stays on VPU/XLU).
    # NOTE: out-of-range targets silently give x_t = 0 (loss = alpha*mod*lse)
    # instead of raising like PyTorch.
    x_t = jnp.sum(jnp.where(col == t, x, 0.0), axis=-1, keepdims=True)
    ce = lse - x_t                                                # (T, 1)

    # --- focal modulation ---
    pt = jnp.exp(-ce)
    # clamp: deliberate benign deviation from PyTorch (guards pow NaN when ce
    # rounds to a tiny negative and gamma is non-integer).
    omp = jnp.maximum(1.0 - pt, 0.0)

    g = float(gamma)
    if g == 2.0:                        # module default: 1 VPU multiply, no EUP
        mod = omp * omp
    elif g == float(int(g)) and g >= 0.0:
        mod = jax.lax.integer_pow(omp, int(g))
    else:
        mod = jnp.power(omp, g)         # generic float gamma (clamped base)

    focal = alpha * mod * ce                                      # (T, 1) f32

    # Lane-dense store: transpose the per-sample column to a (1, T) row (XLU is
    # idle here) so the output block is unmasked full-width vst + a contiguous
    # writeback DMA instead of T/8 masked partial stores.
    out_ref[...] = jnp.transpose(focal, (1, 0))[None].astype(out_ref.dtype)


def focal_loss(logits, targets, alpha=1.0, gamma=2.0, reduce=True, tile_n=None):
    """logits: (N, C) float (any float dtype); targets: (N,) int class indices."""
    n, c = logits.shape
    itemsize = logits.dtype.itemsize
    # min sublane granularity for the second-to-last block dim by dtype width
    sub = {4: 8, 2: 16, 1: 32}.get(itemsize, 8)

    # ---- generation-aware VMEM budget ----
    try:
        vmem_cap = int(getattr(pltpu.get_tpu_info(), "vmem_capacity_bytes", 64 << 20))
    except Exception:
        vmem_cap = 64 << 20           # assume smallest (v7x per-TC) if query unavailable
    # ~56 MiB ceiling on 64-MiB parts (leave headroom), 64 MiB on 128-MiB parts.
    vmem_limit = max(min(7 * vmem_cap // 8, 64 << 20), 32 << 20)

    if tile_n is None:
        # Size purely by bytes.  Per row of the tile we account for:
        #   * 2x double-buffered native logits block .......... 2 * C * itemsize
        #   * full-tile f32 temporaries (x cast, x-m, exp, where) ~ 4 * C * 4
        #   * (T,1) f32 row-stat columns padded to a 128-lane vreg row,
        #     ~6 live at peak .................................. 6 * 512
        headroom = 4 << 20            # compiler scratch, output buffers, misc
        usable = max(vmem_limit - headroom, 1 << 20)
        per_row = c * (2 * itemsize + 4 * 4) + 6 * 512
        tile_n = max(1, usable // per_row)
    # 8192-row cap: multi-MiB blocks for small C, per-step overhead amortized.
    tile_n = min(int(tile_n), 8192, n)
    if tile_n < n:
        tile_n = max(sub, (tile_n // sub) * sub)   # align to sublane granularity
        if tile_n >= n:
            tile_n = n
    # invariant: tile_n == n (full-extent block) or a multiple of `sub` < n,
    # so every BlockSpec dim is either divisible-by-granularity or full-extent.

    num_tiles = pl.cdiv(n, tile_n)
    targets2d = targets.astype(jnp.int32).reshape(n, 1)
    col_ids = jnp.arange(c, dtype=jnp.int32).reshape(1, c)   # resident iota row

    kernel = functools.partial(_focal_loss_kernel,
                               alpha=float(alpha), gamma=float(gamma))

    cost = pl.CostEstimate(
        flops=6 * n * c,                       # max/sub/sum + compare/select
        transcendentals=n * c + 4 * n,         # exp over the tile + per-row exp/log
        bytes_accessed=n * c * itemsize + n * 4 + num_tiles * tile_n * 4 + c * 4,
    )

    out = pl.pallas_call(
        kernel,
        out_shape=jax.ShapeDtypeStruct((num_tiles, 1, tile_n), jnp.float32),
        grid=(num_tiles,),
        in_specs=[
            pl.BlockSpec((1, c), lambda i: (0, 0)),          # iota row, loaded once
            pl.BlockSpec((tile_n, c), lambda i: (i, 0)),     # native-dtype logits
            pl.BlockSpec((tile_n, 1), lambda i: (i, 0)),     # int32 targets column
        ],
        out_specs=pl.BlockSpec((1, 1, tile_n), lambda i: (i, 0, 0)),  # lane-dense
        compiler_params=pltpu.CompilerParams(
            dimension_semantics=("parallel",),
            vmem_limit_bytes=int(vmem_limit),
        ),
        cost_estimate=cost,
    )(col_ids, logits, targets2d)

    # Ragged last tile: Pallas pads the final logits/targets block with
    # unspecified data, so output positions >= n hold garbage (possibly
    # inf/NaN).  They are sliced away HERE and the mean divides by the true n;
    # do NOT fold the reduction into the kernel without masking those rows.
    per_sample = out.reshape(num_tiles * tile_n)[:n]
    if reduce:
        # mean finished in the wrapper so the kernel grid axis stays "parallel"
        return jnp.sum(per_sample) / n
    return per_sample


def _reference(logits, targets, alpha=1.0, gamma=2.0, reduce=True):
    logits = logits.astype(jnp.float32)
    lse = jax.scipy.special.logsumexp(logits, axis=-1)
    x_t = jnp.take_along_axis(logits, targets[:, None].astype(jnp.int32),
                              axis=-1)[:, 0]
    ce = lse - x_t
    pt = jnp.exp(-ce)
    f = alpha * (1.0 - pt) ** gamma * ce
    return jnp.mean(f) if reduce else f


if __name__ == "__main__":
    key = jax.random.PRNGKey(0)
    k1, k2, k3, k4 = jax.random.split(key, 4)

    # 1) small f32 case matching the PyTorch module defaults (single tile)
    N, C = 16, 8
    logits = jax.random.normal(k1, (N, C), dtype=jnp.float32)
    targets = jax.random.randint(k2, (N,), 0, C, dtype=jnp.int32)

    out = jax.block_until_ready(
        focal_loss(logits, targets, alpha=1.0, gamma=2.0, reduce=True))
    ref = _reference(logits, targets, 1.0, 2.0, True)
    assert jnp.allclose(out, ref, rtol=1e-5, atol=1e-5), (out, ref)

    out_ns = jax.block_until_ready(focal_loss(logits, targets, reduce=False))
    ref_ns = _reference(logits, targets, reduce=False)
    assert jnp.allclose(out_ns, ref_ns, rtol=1e-5, atol=1e-5)

    # 2) multi-tile grid + ragged last block + bf16 input (no wrapper pre-cast)
    N2, C2 = 40, 24
    logits2 = jax.random.normal(k3, (N2, C2), dtype=jnp.float32).astype(jnp.bfloat16)
    targets2 = jax.random.randint(k4, (N2,), 0, C2, dtype=jnp.int32)
    out2 = jax.block_until_ready(
        focal_loss(logits2, targets2, alpha=0.25, gamma=2.0, reduce=True, tile_n=16))
    ref2 = _reference(logits2.astype(jnp.float32), targets2, 0.25, 2.0, True)
    assert jnp.allclose(out2, ref2, rtol=1e-4, atol=1e-4), (out2, ref2)

    print("KERNEL_OK")
</pallas_src>

<mosaic_0001>
module attributes {stable_mosaic.version = 11 : i64} {
  func.func @_focal_loss_kernel(%arg0: i32, %arg1: memref<1x8xi32, #tpu.memory_space<vmem>>, %arg2: memref<16x8xf32, #tpu.memory_space<vmem>>, %arg3: memref<16x1xi32, #tpu.memory_space<vmem>>, %arg4: memref<1x1x16xf32, #tpu.memory_space<vmem>>) attributes {dimension_semantics = [#tpu.dimension_semantics<parallel>], iteration_bounds = array<i64: 1>, scalar_prefetch = 0 : i64, scratch_operands = 0 : i64, tpu.core_type = #tpu.core_type<tc>, window_params = [{pipeline_mode = #tpu.pipeline_mode<synchronous>, transform_indices = @transform_0, window_bounds = array<i64: 1, 8>}, {transform_indices = @transform_1, window_bounds = array<i64: 16, 8>}, {transform_indices = @transform_2, window_bounds = array<i64: 16, 1>}, {transform_indices = @transform_3, window_bounds = array<i64: 1, 1, 16>}]} {
    %c0 = arith.constant 0 : index
    %c0_0 = arith.constant 0 : index
    %0 = vector.load %arg2[%c0, %c0_0] : memref<16x8xf32, #tpu.memory_space<vmem>>, vector<16x8xf32>
    %c0_1 = arith.constant 0 : index
    %c0_2 = arith.constant 0 : index
    %1 = vector.load %arg3[%c0_1, %c0_2] : memref<16x1xi32, #tpu.memory_space<vmem>>, vector<16x1xi32>
    %c0_3 = arith.constant 0 : index
    %c0_4 = arith.constant 0 : index
    %2 = vector.load %arg1[%c0_3, %c0_4] : memref<1x8xi32, #tpu.memory_space<vmem>>, vector<1x8xi32>
    %cst = arith.constant dense<0xFF800000> : vector<16xf32>
    %3 = vector.multi_reduction <maximumf>, %0, %cst [1] : vector<16x8xf32> to vector<16xf32>
    %4 = vector.shape_cast %3 : vector<16xf32> to vector<16x1xf32>
    %5 = vector.broadcast %4 : vector<16x1xf32> to vector<16x8xf32>
    %6 = arith.subf %0, %5 : vector<16x8xf32>
    %7 = math.exp %6 : vector<16x8xf32>
    %cst_5 = arith.constant dense<0.000000e+00> : vector<16xf32>
    %8 = vector.multi_reduction <add>, %7, %cst_5 [1] : vector<16x8xf32> to vector<16xf32>
    %9 = vector.shape_cast %8 : vector<16xf32> to vector<16x1xf32>
    %10 = math.log %9 : vector<16x1xf32>
    %11 = arith.addf %4, %10 : vector<16x1xf32>
    %12 = vector.broadcast %2 : vector<1x8xi32> to vector<16x8xi32>
    %13 = vector.broadcast %1 : vector<16x1xi32> to vector<16x8xi32>
    %14 = arith.cmpi eq, %12, %13 : vector<16x8xi32>
    %cst_6 = arith.constant 0.000000e+00 : f32
    %15 = vector.broadcast %cst_6 : f32 to vector<16x8xf32>
    %16 = arith.select %14, %0, %15 : vector<16x8xi1>, vector<16x8xf32>
    %cst_7 = arith.constant dense<0.000000e+00> : vector<16xf32>
    %17 = vector.multi_reduction <add>, %16, %cst_7 [1] : vector<16x8xf32> to vector<16xf32>
    %18 = vector.shape_cast %17 : vector<16xf32> to vector<16x1xf32>
    %19 = arith.subf %11, %18 : vector<16x1xf32>
    %cst_8 = arith.constant 0.000000e+00 : f32
    %20 = vector.broadcast %cst_8 : f32 to vector<16x1xf32>
    %21 = arith.subf %20, %19 : vector<16x1xf32>
    %22 = math.exp %21 : vector<16x1xf32>
    %cst_9 = arith.constant 1.000000e+00 : f32
    %23 = vector.broadcast %cst_9 : f32 to vector<16x1xf32>
    %24 = arith.subf %23, %22 : vector<16x1xf32>
    %cst_10 = arith.constant 0.000000e+00 : f32
    %25 = vector.broadcast %cst_10 : f32 to vector<16x1xf32>
    %26 = arith.maximumf %24, %25 : vector<16x1xf32>
    %27 = arith.mulf %26, %26 : vector<16x1xf32>
    %cst_11 = arith.constant 1.000000e+00 : f32
    %28 = vector.broadcast %cst_11 : f32 to vector<16x1xf32>
    %29 = arith.mulf %28, %27 : vector<16x1xf32>
    %30 = arith.mulf %29, %19 : vector<16x1xf32>
    %31 = tpu.transpose %30, [1, 0] : vector<16x1xf32> -> vector<1x16xf32>
    %32 = vector.shape_cast %31 : vector<1x16xf32> to vector<1x1x16xf32>
    %c0_12 = arith.constant 0 : index
    %c0_13 = arith.constant 0 : index
    %c0_14 = arith.constant 0 : index
    %33 = vector.load %arg4[%c0_12, %c0_13, %c0_14] : memref<1x1x16xf32, #tpu.memory_space<vmem>>, vector<1x1x16xf32>
    tpu.vector_store %arg4[%c0_12, %c0_13, %c0_14], %32 {strides = array<i32>} : memref<1x1x16xf32, #tpu.memory_space<vmem>>, vector<1x1x16xf32>,
    return
  }
  func.func @transform_0(%arg0: i32) -> (i32, i32) {
    %c0_i32 = arith.constant 0 : i32
    %c0_i32_0 = arith.constant 0 : i32
    %c0_i32_1 = arith.constant 0 : i32
    return %c0_i32, %c0_i32_0 : i32, i32
  }
  func.func @transform_1(%arg0: i32) -> (i32, i32) {
    %c0_i32 = arith.constant 0 : i32
    %c0_i32_0 = arith.constant 0 : i32
    return %arg0, %c0_i32 : i32, i32
  }
  func.func @transform_2(%arg0: i32) -> (i32, i32) {
    %c0_i32 = arith.constant 0 : i32
    %c0_i32_0 = arith.constant 0 : i32
    return %arg0, %c0_i32 : i32, i32
  }
  func.func @transform_3(%arg0: i32) -> (i32, i32, i32) {
    %c0_i32 = arith.constant 0 : i32
    %c0_i32_0 = arith.constant 0 : i32
    %c0_i32_1 = arith.constant 0 : i32
    return %arg0, %c0_i32, %c0_i32_0 : i32, i32, i32
  }
}

</mosaic_0001>

<llo_original>
// kernel: tpu_custom_call.1
$region0: #{tpu_custom_call.1}
  #allocation0 [shape = 'u32[]', space=smem, size = 0x4, offset = 0x4, fixed_abs, tag = 'smem constant byte address 0x4 - core index']
  #allocation1 [shape = 'u32[144,128]{1,0:T(1,128)}', space=vmem, size = 0x12000, scoped, tag = 'internal scratch']
  %s0 = inlined_call_operand.vmem [shape: s32[1,8], index: 0, kind: input, shape index: {}]
  %s1 = inlined_call_operand.vmem [shape: f32[16,8], index: 1, kind: input, shape index: {}]
  %s2 = inlined_call_operand.vmem [shape: s32[16,1], index: 2, kind: input, shape index: {}]
  %s3 = inlined_call_operand.hbm [shape: f32[1,1,16], index: 3, kind: output, shape index: {}]
  %s4 = sld [smem:[#allocation0]]
  $region22: #{tpu_custom_call.1} parent=0
    _
  %s6 = ssub.s32 1, %s4
  %s7 = scalar_select 0, %s6, %s4
  $region1: #{tpu_custom_call.1} parent=0
    #allocation2 [shape = 'u8[512]{0}', space=vmem, size = 0x400, scoped, tag = 'output window, operand 0, single buffered']
    #allocation3 [shape = 's32[1]{0}', space=sflag, size = 0x4, scoped, tag = 'scoped memory for tpu_custom_call.1']
    %8 = vsyncpa [#allocation3], 0
    // Predicated region
    $region2: #{tpu_custom_call.1} parent=1 // pred_check
      _
    $region3: #{tpu_custom_call.1} parent=1 // pred_check_branch
      %10 = sbr.rel (0) target = $region5
    $region4: #{tpu_custom_call.1} parent=1 // pred_region
      _
    $region5: #{tpu_custom_call.1} parent=1 // pred_fallthru
      _
    // Predicated region
    $region6: #{tpu_custom_call.1} parent=1 // pred_check
      _
    $region7: #{tpu_custom_call.1} parent=1 // pred_check_branch
      %12 = sbr.rel (0) target = $region9
    $region8: #{tpu_custom_call.1} parent=1 // pred_region
      _
    $region9: #{tpu_custom_call.1} parent=1 // pred_fallthru
      _
    // Predicated region
    $region10: #{tpu_custom_call.1} parent=1 // pred_check
      _
    $region11: #{tpu_custom_call.1} parent=1 // pred_check_branch
      %14 = sbr.rel (0) target = $region13
    $region12: #{tpu_custom_call.1} parent=1 // pred_region
      _
    $region13: #{tpu_custom_call.1} parent=1 // pred_fallthru
      _
    %v15 = vld [vmem:[%s1] sm:$0xff]
    %v16 = vld [vmem:[%s1 + $0x8] sm:$0xff]
    %v17 = vld [vmem:[%s2] sm:$0xff]
    %v18 = vld [vmem:[%s2 + $0x8] sm:$0xff]
    %v19 = vld [vmem:[%s0] sm:$0x1]
    %vm20 = vcmask 64512
    %v21 = vsel %vm20, %v15, -inf
    %22 = vmax.xlane.f32.xlu0 %v21
    %v23 = vpop.xlane.xlu0 %22
    %v24 = vsel %vm20, %v16, -inf
    %25 = vmax.xlane.f32.xlu0 %v24
    %v26 = vpop.xlane.xlu0 %25
    %v27 = vsub.f32 %v15, %v23
    %v28 = vsub.f32 %v16, %v26
    %v29 = vmul.f32 %v27, 1.442695
    %v30 = vpow.pop %v29
    %v31 = vmul.f32 %v28, 1.442695
    %v32 = vpow.pop %v31
    %v33 = vsel %vm20, %v30, 0.0
    %34 = vadd.xlane.f32.xlu0 %v33
    %v35 = vpop.xlane.xlu0 %34
    %v36 = vsel %vm20, %v32, 0.0
    %37 = vadd.xlane.f32.xlu0 %v36
    %v38 = vpop.xlane.xlu0 %37
    %v39 = vlog2.pop %v35
    %v40 = vmul.f32 %v39, 0.6931472
    %v41 = vlog2.pop %v38
    %v42 = vmul.f32 %v41, 0.6931472
    %v43 = vadd.f32 %v23, %v40
    %v44 = vadd.f32 %v26, %v42
    %v45 = vlaneseq
    %v46 = vshrl.u32 %v45, 7
    %v47 = vsub.s32 0, %v46
    %v48 = vrot.slane %v19, %v47
    %49 = vset.pattern.permute.xlu0 0
    %50 = vperm.xlu0 %49, %v17
    %v51 = vpop.permute.xlu0 %50
    %52 = vset.pattern.permute.xlu0 0
    %53 = vperm.xlu0 %52, %v18
    %v54 = vpop.permute.xlu0 %53
    %vm55 = vcmp.eq.s32.totalorder %v48, %v51
    %vm56 = vcmp.eq.s32.totalorder %v48, %v54
    %v57 = vsel %vm55, %v15, 0.0
    %v58 = vsel %vm56, %v16, 0.0
    %v59 = vsel %vm20, %v57, 0.0
    %60 = vadd.xlane.f32.xlu0 %v59
    %v61 = vpop.xlane.xlu0 %60
    %v62 = vsel %vm20, %v58, 0.0
    %63 = vadd.xlane.f32.xlu0 %v62
    %v64 = vpop.xlane.xlu0 %63
    %v65 = vsub.f32 %v43, %v61
    %v66 = vsub.f32 %v44, %v64
    %v67 = vsub.f32 0.0, %v65
    %v68 = vsub.f32 0.0, %v66
    %v69 = vmul.f32 %v67, 1.442695
    %v70 = vpow.pop %v69
    %v71 = vmul.f32 %v68, 1.442695
    %v72 = vpow.pop %v71
    %v73 = vsub.f32 1.0, %v70
    %v74 = vsub.f32 1.0, %v72
    %v75 = vmax.f32 %v73, 0.0
    %v76 = vmax.f32 %v74, 0.0
    %v77 = vmul.f32 %v75, %v75
    %v78 = vmul.f32 %v76, %v76
    %v79 = vmul.f32 %v77, %v65
    %v80 = vmul.f32 %v78, %v66
    %81 = vxpose.xlu0.b32.start [1/16] %v79, 128
    %82 = vxpose.xlu0.b32.cont [2/16] %v80, 128
    %83 = vxpose.xlu0.b32.cont [3/16] 0.0, 128
    %84 = vxpose.xlu0.b32.cont [4/16] 0.0, 128
    %85 = vxpose.xlu0.b32.cont [5/16] 0.0, 128
    %86 = vxpose.xlu0.b32.cont [6/16] 0.0, 128
    %87 = vxpose.xlu0.b32.cont [7/16] 0.0, 128
    %88 = vxpose.xlu0.b32.cont [8/16] 0.0, 128
    %89 = vxpose.xlu0.b32.cont [9/16] 0.0, 128
    %90 = vxpose.xlu0.b32.cont [10/16] 0.0, 128
    %91 = vxpose.xlu0.b32.cont [11/16] 0.0, 128
    %92 = vxpose.xlu0.b32.cont [12/16] 0.0, 128
    %93 = vxpose.xlu0.b32.cont [13/16] 0.0, 128
    %94 = vxpose.xlu0.b32.cont [14/16] 0.0, 128
    %95 = vxpose.xlu0.b32.cont [15/16] 0.0, 128
    %96 = vxpose.xlu0.b32.end [16/16] 0.0, 128
    %v97 = vpop.trf.xlu0
    %v98 = vpop.trf.xlu0
    %v99 = vpop.trf.xlu0
    %v100 = vpop.trf.xlu0
    %v101 = vpop.trf.xlu0
    %v102 = vpop.trf.xlu0
    %v103 = vpop.trf.xlu0
    %v104 = vpop.trf.xlu0
    %v105 = vpop.trf.xlu0
    %v106 = vpop.trf.xlu0
    %v107 = vpop.trf.xlu0
    %v108 = vpop.trf.xlu0
    %v109 = vpop.trf.xlu0
    %v110 = vpop.trf.xlu0
    %v111 = vpop.trf.xlu0
    %v112 = vpop.trf.xlu0
    %vm113 = vcmask 122880
    %114 = vst.msk [vmem:[#allocation2] sm:$0x1] %vm113, %v97
    // Predicated region
    $region14: #{tpu_custom_call.1} parent=1 // pred_check
      _
    $region15: #{tpu_custom_call.1} parent=1 // pred_check_branch
      %116 = sbr.rel (0) target = $region17
    $region16: #{tpu_custom_call.1} parent=1 // pred_region
      %s118 = ssub.s32 16, 16
      %119 = vsyncadd [#allocation3], %s118
      %s121 = sshll.u32 [#allocation2], 4
      %s122 = int_to_ptr.vmem [resolvable:$true] %s121
      %124 = dma.vmem_to_hbm [thread:$0]  %s122, 16, %s3, [#allocation3]
    $region17: #{tpu_custom_call.1} parent=1 // pred_fallthru
      _
    // Predicated region
    $region18: #{tpu_custom_call.1} parent=1 // pred_check
      _
    $region19: #{tpu_custom_call.1} parent=1 // pred_check_branch
      %126 = sbr.rel (0) target = $region21
    $region20: #{tpu_custom_call.1} parent=1 // pred_region
      %127 = dma.done [#allocation3], 16
    $region21: #{tpu_custom_call.1} parent=1 // pred_fallthru
      _
    %128 = vsyncpa [#allocation3], 1

</llo_original>
